<compile_context>
chip_gen: v7x
topology: tpu7x:2x2x1
jax: 0.10.0
libtpu: 0.0.40
codegen_flags: <defaults>
</compile_context>

<pallas_src>
import jax
import jax.numpy as jnp
from jax.experimental import pallas as pl
from jax.experimental.pallas import tpu as pltpu

IN_FEATURES = 500
IN_PAD = 512       # contraction dim padded to a clean multiple of 128
HIDDEN = 100
HIDDEN_PAD = 128   # lane-dense hidden width
CODE_LEN = 32
CODE_PAD = 128     # lane-dense output width (sliced back to code_len outside)
BN_EPS = 1e-5

# Packed per-feature parameter rows (b1 is intentionally absent: it cancels
# under train-mode BatchNorm's batch-mean subtraction).
GAMMA_ROW, BETA_ROW, B2_ROW = 0, 1, 2


def lenet_codegen_kernel(x_ref, w1_ref, w2_ref, p_ref, o_ref):
    # ReLU on the input (VPU), then bf16 cast so both matmuls are native MXU.
    x = jnp.maximum(x_ref[...], 0.0).astype(jnp.bfloat16)

    # Packed per-feature parameters: one (3, 128) f32 load, sliced here.
    p = p_ref[...]
    gamma = p[GAMMA_ROW:GAMMA_ROW + 1, :]
    beta = p[BETA_ROW:BETA_ROW + 1, :]
    b2 = p[B2_ROW:B2_ROW + 1, :]

    # fc1: (B, 512)bf16 @ (512, 128)bf16 -> f32 accumulate (MXU).
    # No "+ b1": exactly cancelled by the batch-mean subtraction below.
    h = jnp.dot(x, w1_ref[...], preferred_element_type=jnp.float32)

    # BatchNorm1d (training mode: batch stats, biased variance, eps=1e-5).
    # Single-pass stats; 1/B is a compile-time constant multiply.
    inv_b = 1.0 / h.shape[0]
    s1 = jnp.sum(h, axis=0, keepdims=True)
    s2 = jnp.sum(h * h, axis=0, keepdims=True)
    mean = s1 * inv_b
    var = s2 * inv_b - mean * mean
    # Affine folded into the normalization: h_norm = h * scale + shift.
    scale = gamma * jax.lax.rsqrt(var + BN_EPS)
    shift = beta - mean * scale
    h_norm = h * scale + shift

    # sigmoid: exp on the EUP, denominator reciprocal also on the EUP
    # (approx) instead of a VPU f32 divide.
    s = pl.reciprocal(1.0 + jnp.exp(-h_norm), approx=True)

    # fc2: (B, 128)bf16 @ (128, 128)bf16 -> f32 accumulate (MXU).
    z = jnp.dot(s.astype(jnp.bfloat16), w2_ref[...],
                preferred_element_type=jnp.float32) + b2

    # tanh (EUP); output block is a full 128 lanes -> unmasked stores.
    o_ref[...] = jnp.tanh(z)


def prepare_lenet_params(w1, b1, gamma, beta, w2, b2):
    """One-time weight prep (call once at model init, NOT per forward).

    w1: (500, 100), w2: (100, code_len), vectors 1-D.  b1 is accepted for
    interface parity but dropped: it is exactly cancelled by train-mode
    BatchNorm's batch-mean subtraction.
    Returns (w1_padded bf16 (512,128), w2_padded bf16 (128,128), params f32 (3,128)).
    """
    del b1  # mathematically redundant under train-mode BN
    code_len = w2.shape[1]

    w1_p = jnp.zeros((IN_PAD, HIDDEN_PAD), jnp.float32)
    w1_p = w1_p.at[:IN_FEATURES, :HIDDEN].set(w1)
    w2_p = jnp.zeros((HIDDEN_PAD, CODE_PAD), jnp.float32)
    w2_p = w2_p.at[:HIDDEN, :code_len].set(w2)

    params = jnp.zeros((3, HIDDEN_PAD), jnp.float32)
    params = params.at[GAMMA_ROW, :HIDDEN].set(gamma)  # padded gamma stays 0 -> inert
    params = params.at[BETA_ROW, :HIDDEN].set(beta)
    params = params.at[B2_ROW, :code_len].set(b2)

    return w1_p.astype(jnp.bfloat16), w2_p.astype(jnp.bfloat16), params


def lenet_codegen_forward(x, w1_padded, w2_padded, params, code_len=CODE_LEN):
    """x: (B, 500) f32; weights pre-prepared by prepare_lenet_params()."""
    B = x.shape[0]

    # Only per-call prep: zero-pad the contraction dim 500 -> 512 (tiny).
    x_p = jnp.pad(x, ((0, 0), (0, IN_PAD - IN_FEATURES)))

    out_pad = pl.pallas_call(
        lenet_codegen_kernel,
        out_shape=jax.ShapeDtypeStruct((B, CODE_PAD), jnp.float32),
        grid=(1,),
        in_specs=[
            pl.BlockSpec((B, IN_PAD), lambda i: (0, 0)),
            pl.BlockSpec((IN_PAD, HIDDEN_PAD), lambda i: (0, 0)),
            pl.BlockSpec((HIDDEN_PAD, CODE_PAD), lambda i: (0, 0)),
            pl.BlockSpec((3, HIDDEN_PAD), lambda i: (0, 0)),
        ],
        out_specs=pl.BlockSpec((B, CODE_PAD), lambda i: (0, 0)),
        compiler_params=pltpu.CompilerParams(
            dimension_semantics=("arbitrary",)
        ),
    )(x_p, w1_padded, w2_padded, params)

    return out_pad[:, :code_len]


def reference_forward_f32(x, w1, b1, gamma, beta, w2, b2):
    """Pure-f32 JAX reference of the PyTorch module (train-mode BN)."""
    x = jnp.maximum(x, 0.0)
    h = x @ w1 + b1
    mean = jnp.mean(h, axis=0, keepdims=True)
    var = jnp.mean((h - mean) ** 2, axis=0, keepdims=True)
    h = (h - mean) / jnp.sqrt(var + BN_EPS)
    h = h * gamma + beta
    s = jax.nn.sigmoid(h)
    z = s @ w2 + b2
    return jnp.tanh(z)


def reference_forward_bf16(x, w1, b1, gamma, beta, w2, b2):
    """Pure-JAX reference following the kernel's bf16 matmul path (keeps b1,
    two-pass variance and exact divide — the kernel's algebraic rewrites are
    equivalent up to f32 rounding / EUP approx-reciprocal slack)."""
    xr = jnp.maximum(x, 0.0).astype(jnp.bfloat16)
    h = jnp.dot(xr, w1.astype(jnp.bfloat16),
                preferred_element_type=jnp.float32) + b1
    mean = jnp.mean(h, axis=0, keepdims=True)
    var = jnp.mean((h - mean) ** 2, axis=0, keepdims=True)
    scale = gamma * jax.lax.rsqrt(var + BN_EPS)
    shift = beta - mean * scale
    s = 1.0 / (1.0 + jnp.exp(-(h * scale + shift)))
    z = jnp.dot(s.astype(jnp.bfloat16), w2.astype(jnp.bfloat16),
                preferred_element_type=jnp.float32) + b2
    return jnp.tanh(z)


if __name__ == "__main__":
    key = jax.random.PRNGKey(0)
    k_x, k_w1, k_b1, k_w2, k_b2, k_g, k_be = jax.random.split(key, 7)

    B = 8  # batch size

    x = jax.random.normal(k_x, (B, IN_FEATURES), dtype=jnp.float32)

    # PyTorch-like uniform fan-in init (weights pre-transposed to (in, out)).
    bound1 = 1.0 / (IN_FEATURES ** 0.5)
    w1 = jax.random.uniform(k_w1, (IN_FEATURES, HIDDEN), jnp.float32, -bound1, bound1)
    b1 = jax.random.uniform(k_b1, (HIDDEN,), jnp.float32, -bound1, bound1)

    # BatchNorm affine (perturbed slightly from the 1/0 init to exercise the path).
    gamma = 1.0 + 0.1 * jax.random.normal(k_g, (HIDDEN,), dtype=jnp.float32)
    beta = 0.1 * jax.random.normal(k_be, (HIDDEN,), dtype=jnp.float32)

    bound2 = 1.0 / (HIDDEN ** 0.5)
    w2 = jax.random.uniform(k_w2, (HIDDEN, CODE_LEN), jnp.float32, -bound2, bound2)
    b2 = jax.random.uniform(k_b2, (CODE_LEN,), jnp.float32, -bound2, bound2)

    # One-time prep (padding / packing / bf16 cast) — NOT part of the per-call path.
    w1_padded, w2_padded, params = prepare_lenet_params(w1, b1, gamma, beta, w2, b2)
    w1_padded, w2_padded, params = jax.block_until_ready(
        (w1_padded, w2_padded, params))

    out = lenet_codegen_forward(x, w1_padded, w2_padded, params)
    out = jax.block_until_ready(out)
    assert out.shape == (B, CODE_LEN)

    # Check against a reference following the same bf16 matmul path
    # (tolerance covers b1-cancellation rounding + approx-reciprocal slack).
    ref_bf16 = reference_forward_bf16(x, w1, b1, gamma, beta, w2, b2)
    assert jnp.allclose(out, ref_bf16, atol=1e-2, rtol=1e-2), \
        "mismatch vs bf16-matmul JAX reference"

    # Sanity check against the full-f32 reference (bf16 quantization slack).
    ref_f32 = reference_forward_f32(x, w1, b1, gamma, beta, w2, b2)
    assert jnp.allclose(out, ref_f32, atol=5e-2, rtol=5e-2), \
        "mismatch vs f32 JAX reference"

    print("KERNEL_OK")
</pallas_src>

<mosaic_0001>
module attributes {stable_mosaic.version = 11 : i64} {
  func.func @lenet_codegen_kernel(%arg0: i32, %arg1: memref<8x512xf32, #tpu.memory_space<vmem>>, %arg2: memref<512x128xbf16, #tpu.memory_space<vmem>>, %arg3: memref<128x128xbf16, #tpu.memory_space<vmem>>, %arg4: memref<3x128xf32, #tpu.memory_space<vmem>>, %arg5: memref<8x128xf32, #tpu.memory_space<vmem>>) attributes {dimension_semantics = [#tpu.dimension_semantics<arbitrary>], iteration_bounds = array<i64: 1>, scalar_prefetch = 0 : i64, scratch_operands = 0 : i64, tpu.core_type = #tpu.core_type<tc>, window_params = [{pipeline_mode = #tpu.pipeline_mode<synchronous>, transform_indices = @transform_0, window_bounds = array<i64: 8, 512>}, {pipeline_mode = #tpu.pipeline_mode<synchronous>, transform_indices = @transform_1, window_bounds = array<i64: 512, 128>}, {pipeline_mode = #tpu.pipeline_mode<synchronous>, transform_indices = @transform_2, window_bounds = array<i64: 128, 128>}, {pipeline_mode = #tpu.pipeline_mode<synchronous>, transform_indices = @transform_3, window_bounds = array<i64: 3, 128>}, {pipeline_mode = #tpu.pipeline_mode<synchronous>, transform_indices = @transform_4, window_bounds = array<i64: 8, 128>}]} {
    %c0 = arith.constant 0 : index
    %c0_0 = arith.constant 0 : index
    %0 = vector.load %arg1[%c0, %c0_0] : memref<8x512xf32, #tpu.memory_space<vmem>>, vector<8x512xf32>
    %cst = arith.constant 0.000000e+00 : f32
    %1 = vector.broadcast %cst : f32 to vector<8x512xf32>
    %2 = arith.maximumf %0, %1 : vector<8x512xf32>
    %3 = arith.truncf %2 : vector<8x512xf32> to vector<8x512xbf16>
    %c0_1 = arith.constant 0 : index
    %c0_2 = arith.constant 0 : index
    %4 = vector.load %arg4[%c0_1, %c0_2] : memref<3x128xf32, #tpu.memory_space<vmem>>, vector<3x128xf32>
    %5 = vector.extract_strided_slice %4 {offsets = [0, 0], sizes = [1, 128], strides = [1, 1]} : vector<3x128xf32> to vector<1x128xf32>
    %6 = vector.extract_strided_slice %4 {offsets = [1, 0], sizes = [1, 128], strides = [1, 1]} : vector<3x128xf32> to vector<1x128xf32>
    %7 = vector.extract_strided_slice %4 {offsets = [2, 0], sizes = [1, 128], strides = [1, 1]} : vector<3x128xf32> to vector<1x128xf32>
    %c0_3 = arith.constant 0 : index
    %c0_4 = arith.constant 0 : index
    %8 = vector.load %arg2[%c0_3, %c0_4] : memref<512x128xbf16, #tpu.memory_space<vmem>>, vector<512x128xbf16>
    %cst_5 = arith.constant dense<0.000000e+00> : vector<8x128xf32>
    %9 = tpu.matmul %3, %8, %cst_5 {dimension_numbers = #tpu.dot_dimension_numbers<[1], [0], [0], [1], [0, 0, 1, 1], [], []>} : vector<8x512xbf16>, vector<512x128xbf16>, vector<8x128xf32> -> vector<8x128xf32>
    %cst_6 = arith.constant dense<0.000000e+00> : vector<128xf32>
    %10 = vector.multi_reduction <add>, %9, %cst_6 [0] : vector<8x128xf32> to vector<128xf32>
    %11 = vector.shape_cast %10 : vector<128xf32> to vector<1x128xf32>
    %12 = arith.mulf %9, %9 : vector<8x128xf32>
    %cst_7 = arith.constant dense<0.000000e+00> : vector<128xf32>
    %13 = vector.multi_reduction <add>, %12, %cst_7 [0] : vector<8x128xf32> to vector<128xf32>
    %14 = vector.shape_cast %13 : vector<128xf32> to vector<1x128xf32>
    %cst_8 = arith.constant 1.250000e-01 : f32
    %15 = vector.broadcast %cst_8 : f32 to vector<1x128xf32>
    %16 = arith.mulf %11, %15 : vector<1x128xf32>
    %cst_9 = arith.constant 1.250000e-01 : f32
    %17 = vector.broadcast %cst_9 : f32 to vector<1x128xf32>
    %18 = arith.mulf %14, %17 : vector<1x128xf32>
    %19 = arith.mulf %16, %16 : vector<1x128xf32>
    %20 = arith.subf %18, %19 : vector<1x128xf32>
    %cst_10 = arith.constant 9.99999974E-6 : f32
    %21 = vector.broadcast %cst_10 : f32 to vector<1x128xf32>
    %22 = arith.addf %20, %21 : vector<1x128xf32>
    %23 = math.rsqrt %22 : vector<1x128xf32>
    %24 = arith.mulf %5, %23 : vector<1x128xf32>
    %25 = arith.mulf %16, %24 : vector<1x128xf32>
    %26 = arith.subf %6, %25 : vector<1x128xf32>
    %27 = vector.broadcast %24 : vector<1x128xf32> to vector<8x128xf32>
    %28 = arith.mulf %9, %27 : vector<8x128xf32>
    %29 = vector.broadcast %26 : vector<1x128xf32> to vector<8x128xf32>
    %30 = arith.addf %28, %29 : vector<8x128xf32>
    %cst_11 = arith.constant 0.000000e+00 : f32
    %31 = vector.broadcast %cst_11 : f32 to vector<8x128xf32>
    %32 = arith.subf %31, %30 : vector<8x128xf32>
    %33 = math.exp %32 : vector<8x128xf32>
    %cst_12 = arith.constant 1.000000e+00 : f32
    %34 = vector.broadcast %cst_12 : f32 to vector<8x128xf32>
    %35 = arith.addf %34, %33 : vector<8x128xf32>
    %36 = tpu.reciprocal %35 {approx = true} : vector<8x128xf32> -> vector<8x128xf32>
    %37 = arith.truncf %36 : vector<8x128xf32> to vector<8x128xbf16>
    %c0_13 = arith.constant 0 : index
    %c0_14 = arith.constant 0 : index
    %38 = vector.load %arg3[%c0_13, %c0_14] : memref<128x128xbf16, #tpu.memory_space<vmem>>, vector<128x128xbf16>
    %cst_15 = arith.constant dense<0.000000e+00> : vector<8x128xf32>
    %39 = tpu.matmul %37, %38, %cst_15 {dimension_numbers = #tpu.dot_dimension_numbers<[1], [0], [0], [1], [0, 0, 1, 1], [], []>} : vector<8x128xbf16>, vector<128x128xbf16>, vector<8x128xf32> -> vector<8x128xf32>
    %40 = vector.broadcast %7 : vector<1x128xf32> to vector<8x128xf32>
    %41 = arith.addf %39, %40 : vector<8x128xf32>
    %42 = math.tanh %41 : vector<8x128xf32>
    %c0_16 = arith.constant 0 : index
    %c0_17 = arith.constant 0 : index
    %43 = vector.load %arg5[%c0_16, %c0_17] : memref<8x128xf32, #tpu.memory_space<vmem>>, vector<8x128xf32>
    tpu.vector_store %arg5[%c0_16, %c0_17], %42 {strides = array<i32>} : memref<8x128xf32, #tpu.memory_space<vmem>>, vector<8x128xf32>,
    return
  }
  func.func @transform_0(%arg0: i32) -> (i32, i32) {
    %c0_i32 = arith.constant 0 : i32
    %c0_i32_0 = arith.constant 0 : i32
    %c0_i32_1 = arith.constant 0 : i32
    return %c0_i32, %c0_i32_0 : i32, i32
  }
  func.func @transform_1(%arg0: i32) -> (i32, i32) {
    %c0_i32 = arith.constant 0 : i32
    %c0_i32_0 = arith.constant 0 : i32
    %c0_i32_1 = arith.constant 0 : i32
    return %c0_i32, %c0_i32_0 : i32, i32
  }
  func.func @transform_2(%arg0: i32) -> (i32, i32) {
    %c0_i32 = arith.constant 0 : i32
    %c0_i32_0 = arith.constant 0 : i32
    %c0_i32_1 = arith.constant 0 : i32
    return %c0_i32, %c0_i32_0 : i32, i32
  }
  func.func @transform_3(%arg0: i32) -> (i32, i32) {
    %c0_i32 = arith.constant 0 : i32
    %c0_i32_0 = arith.constant 0 : i32
    %c0_i32_1 = arith.constant 0 : i32
    return %c0_i32, %c0_i32_0 : i32, i32
  }
  func.func @transform_4(%arg0: i32) -> (i32, i32) {
    %c0_i32 = arith.constant 0 : i32
    %c0_i32_0 = arith.constant 0 : i32
    %c0_i32_1 = arith.constant 0 : i32
    return %c0_i32, %c0_i32_0 : i32, i32
  }
}

</mosaic_0001>

<llo_original>
// kernel: tpu_custom_call.1
$region0: #{tpu_custom_call.1}
  #allocation0 [shape = 'u32[]', space=smem, size = 0x4, offset = 0x4, fixed_abs, tag = 'smem constant byte address 0x4 - core index']
  #allocation1 [shape = 'u32[144,128]{1,0:T(1,128)}', space=vmem, size = 0x12000, scoped, tag = 'internal scratch']
  %s0 = inlined_call_operand.hbm [shape: f32[8,512], index: 0, kind: input, shape index: {}]
  %s1 = inlined_call_operand.hbm [shape: bf16[512,128], index: 1, kind: input, shape index: {}]
  %s2 = inlined_call_operand.hbm [shape: bf16[128,128], index: 2, kind: input, shape index: {}]
  %s3 = inlined_call_operand.vmem [shape: f32[3,128], index: 3, kind: input, shape index: {}]
  %s4 = inlined_call_operand.hbm [shape: f32[8,128], index: 4, kind: output, shape index: {}]
  %s5 = sld [smem:[#allocation0]]
  $region38: #{tpu_custom_call.1} parent=0
    _
  %s7 = ssub.s32 1, %s5
  %s8 = scalar_select 0, %s7, %s5
  $region1: #{tpu_custom_call.1} parent=0
    #allocation2 [shape = 'u8[16384]{0}', space=vmem, size = 0x4000, scoped, tag = 'input window, operand 0, single buffered']
    #allocation3 [shape = 's32[1]{0}', space=sflag, size = 0x4, scoped, tag = 'scoped memory for tpu_custom_call.1']
    #allocation4 [shape = 's32[1]{0}', space=sflag, size = 0x4, scoped, tag = 'scoped memory for tpu_custom_call.1']
    #allocation5 [shape = 'u8[131072]{0}', space=vmem, size = 0x20000, scoped, tag = 'input window, operand 1, single buffered']
    #allocation6 [shape = 's32[1]{0}', space=sflag, size = 0x4, scoped, tag = 'scoped memory for tpu_custom_call.1']
    #allocation7 [shape = 'u8[32768]{0}', space=vmem, size = 0x8000, scoped, tag = 'input window, operand 2, single buffered']
    #allocation8 [shape = 'u8[4096]{0}', space=vmem, size = 0x1000, scoped, tag = 'output window, operand 0, single buffered']
    %9 = vsyncpa [#allocation3], 0
    %10 = vsyncpa [#allocation6], 0
    %11 = vsyncpa [#allocation4], 0
    // Predicated region
    $region2: #{tpu_custom_call.1} parent=1 // pred_check
      _
    $region3: #{tpu_custom_call.1} parent=1 // pred_check_branch
      %13 = sbr.rel (0) target = $region5
    $region4: #{tpu_custom_call.1} parent=1 // pred_region
      %s15 = ssub.s32 512, 512
      %16 = vsyncadd [#allocation3], %s15
      %s18 = sshll.u32 [#allocation2], 4
      %s19 = int_to_ptr.vmem [resolvable:$true] %s18
      %21 = dma.hbm_to_vmem [thread:$0]  %s0, 512, %s19, [#allocation3]
    $region5: #{tpu_custom_call.1} parent=1 // pred_fallthru
      _
    // Predicated region
    $region6: #{tpu_custom_call.1} parent=1 // pred_check
      _
    $region7: #{tpu_custom_call.1} parent=1 // pred_check_branch
      %23 = sbr.rel (0) target = $region9
    $region8: #{tpu_custom_call.1} parent=1 // pred_region
      %s25 = ssub.s32 4096, 4096
      %26 = vsyncadd [#allocation6], %s25
      %s27 = sshll.u32 [#allocation5], 4
      %s28 = int_to_ptr.vmem [resolvable:$true] %s27
      %33 = dma.hbm_to_vmem [thread:$0]  %s1, 4096, %s28, [#allocation6], 64, 64, 4
    $region9: #{tpu_custom_call.1} parent=1 // pred_fallthru
      _
    // Predicated region
    $region10: #{tpu_custom_call.1} parent=1 // pred_check
      _
    $region11: #{tpu_custom_call.1} parent=1 // pred_check_branch
      %35 = sbr.rel (0) target = $region13
    $region12: #{tpu_custom_call.1} parent=1 // pred_region
      %s37 = ssub.s32 1024, 1024
      %38 = vsyncadd [#allocation6], %s37
      %s39 = sshll.u32 [#allocation7], 4
      %s40 = int_to_ptr.vmem [resolvable:$true] %s39
      %45 = dma.hbm_to_vmem [thread:$0]  %s2, 1024, %s40, [#allocation6], 64, 64, 4
    $region13: #{tpu_custom_call.1} parent=1 // pred_fallthru
      _
    // Predicated region
    $region14: #{tpu_custom_call.1} parent=1 // pred_check
      _
    $region15: #{tpu_custom_call.1} parent=1 // pred_check_branch
      %47 = sbr.rel (0) target = $region17
    $region16: #{tpu_custom_call.1} parent=1 // pred_region
      _
    $region17: #{tpu_custom_call.1} parent=1 // pred_fallthru
      _
    // Predicated region
    $region18: #{tpu_custom_call.1} parent=1 // pred_check
      _
    $region19: #{tpu_custom_call.1} parent=1 // pred_check_branch
      %49 = sbr.rel (0) target = $region21
    $region20: #{tpu_custom_call.1} parent=1 // pred_region
      %50 = dma.done [#allocation3], 512
    $region21: #{tpu_custom_call.1} parent=1 // pred_fallthru
      _
    // Predicated region
    $region22: #{tpu_custom_call.1} parent=1 // pred_check
      _
    $region23: #{tpu_custom_call.1} parent=1 // pred_check_branch
      %52 = sbr.rel (0) target = $region25
    $region24: #{tpu_custom_call.1} parent=1 // pred_region
      %53 = dma.done [#allocation6], 4096
    $region25: #{tpu_custom_call.1} parent=1 // pred_fallthru
      _
    // Predicated region
    $region26: #{tpu_custom_call.1} parent=1 // pred_check
      _
    $region27: #{tpu_custom_call.1} parent=1 // pred_check_branch
      %55 = sbr.rel (0) target = $region29
    $region28: #{tpu_custom_call.1} parent=1 // pred_region
      %56 = dma.done [#allocation6], 1024
    $region29: #{tpu_custom_call.1} parent=1 // pred_fallthru
      _
    %v58 = vld [vmem:[#allocation2] sm:$0xff]
    %v59 = vld [vmem:[#allocation2 + $0x8] sm:$0xff]
    %v60 = vld [vmem:[#allocation2 + $0x10] sm:$0xff]
    %v61 = vld [vmem:[#allocation2 + $0x18] sm:$0xff]
    %v62 = vmax.f32 %v58, 0.0
    %v63 = vmax.f32 %v59, 0.0
    %v64 = vmax.f32 %v60, 0.0
    %v65 = vmax.f32 %v61, 0.0
    %v66 = vpack.c.bf16 %v62, %v62
    %v67 = vpack.c.bf16 %v63, %v63
    %v68 = vpack.c.bf16 %v64, %v64
    %v69 = vpack.c.bf16 %v65, %v65
    %v70 = vld [vmem:[%s3] sm:$0x7]
    %v71 = vld [vmem:[#allocation5] sm:$0xf]
    %v72 = vld [vmem:[#allocation5 + $0x4] sm:$0xf]
    %v73 = vld [vmem:[#allocation5 + $0x8] sm:$0xf]
    %v74 = vld [vmem:[#allocation5 + $0xc] sm:$0xf]
    %v75 = vld [vmem:[#allocation5 + $0x10] sm:$0xf]
    %v76 = vld [vmem:[#allocation5 + $0x14] sm:$0xf]
    %v77 = vld [vmem:[#allocation5 + $0x18] sm:$0xf]
    %v78 = vld [vmem:[#allocation5 + $0x1c] sm:$0xf]
    %v79 = vld [vmem:[#allocation5 + $0x20] sm:$0xf]
    %v80 = vld [vmem:[#allocation5 + $0x24] sm:$0xf]
    %v81 = vld [vmem:[#allocation5 + $0x28] sm:$0xf]
    %v82 = vld [vmem:[#allocation5 + $0x2c] sm:$0xf]
    %v83 = vld [vmem:[#allocation5 + $0x30] sm:$0xf]
    %v84 = vld [vmem:[#allocation5 + $0x34] sm:$0xf]
    %v85 = vld [vmem:[#allocation5 + $0x38] sm:$0xf]
    %v86 = vld [vmem:[#allocation5 + $0x3c] sm:$0xf]
    %v87 = vld [vmem:[#allocation5 + $0x40] sm:$0xf]
    %v88 = vld [vmem:[#allocation5 + $0x44] sm:$0xf]
    %v89 = vld [vmem:[#allocation5 + $0x48] sm:$0xf]
    %v90 = vld [vmem:[#allocation5 + $0x4c] sm:$0xf]
    %v91 = vld [vmem:[#allocation5 + $0x50] sm:$0xf]
    %v92 = vld [vmem:[#allocation5 + $0x54] sm:$0xf]
    %v93 = vld [vmem:[#allocation5 + $0x58] sm:$0xf]
    %v94 = vld [vmem:[#allocation5 + $0x5c] sm:$0xf]
    %v95 = vld [vmem:[#allocation5 + $0x60] sm:$0xf]
    %v96 = vld [vmem:[#allocation5 + $0x64] sm:$0xf]
    %v97 = vld [vmem:[#allocation5 + $0x68] sm:$0xf]
    %v98 = vld [vmem:[#allocation5 + $0x6c] sm:$0xf]
    %v99 = vld [vmem:[#allocation5 + $0x70] sm:$0xf]
    %v100 = vld [vmem:[#allocation5 + $0x74] sm:$0xf]
    %v101 = vld [vmem:[#allocation5 + $0x78] sm:$0xf]
    %v102 = vld [vmem:[#allocation5 + $0x7c] sm:$0xf]
    %v103 = vld [vmem:[#allocation5 + $0x80] sm:$0xf]
    %v104 = vld [vmem:[#allocation5 + $0x84] sm:$0xf]
    %v105 = vld [vmem:[#allocation5 + $0x88] sm:$0xf]
    %v106 = vld [vmem:[#allocation5 + $0x8c] sm:$0xf]
    %v107 = vld [vmem:[#allocation5 + $0x90] sm:$0xf]
    %v108 = vld [vmem:[#allocation5 + $0x94] sm:$0xf]
    %v109 = vld [vmem:[#allocation5 + $0x98] sm:$0xf]
    %v110 = vld [vmem:[#allocation5 + $0x9c] sm:$0xf]
    %v111 = vld [vmem:[#allocation5 + $0xa0] sm:$0xf]
    %v112 = vld [vmem:[#allocation5 + $0xa4] sm:$0xf]
    %v113 = vld [vmem:[#allocation5 + $0xa8] sm:$0xf]
    %v114 = vld [vmem:[#allocation5 + $0xac] sm:$0xf]
    %v115 = vld [vmem:[#allocation5 + $0xb0] sm:$0xf]
    %v116 = vld [vmem:[#allocation5 + $0xb4] sm:$0xf]
    %v117 = vld [vmem:[#allocation5 + $0xb8] sm:$0xf]
    %v118 = vld [vmem:[#allocation5 + $0xbc] sm:$0xf]
    %v119 = vld [vmem:[#allocation5 + $0xc0] sm:$0xf]
    %v120 = vld [vmem:[#allocation5 + $0xc4] sm:$0xf]
    %v121 = vld [vmem:[#allocation5 + $0xc8] sm:$0xf]
    %v122 = vld [vmem:[#allocation5 + $0xcc] sm:$0xf]
    %v123 = vld [vmem:[#allocation5 + $0xd0] sm:$0xf]
    %v124 = vld [vmem:[#allocation5 + $0xd4] sm:$0xf]
    %v125 = vld [vmem:[#allocation5 + $0xd8] sm:$0xf]
    %v126 = vld [vmem:[#allocation5 + $0xdc] sm:$0xf]
    %v127 = vld [vmem:[#allocation5 + $0xe0] sm:$0xf]
    %v128 = vld [vmem:[#allocation5 + $0xe4] sm:$0xf]
    %v129 = vld [vmem:[#allocation5 + $0xe8] sm:$0xf]
    %v130 = vld [vmem:[#allocation5 + $0xec] sm:$0xf]
    %v131 = vld [vmem:[#allocation5 + $0xf0] sm:$0xf]
    %v132 = vld [vmem:[#allocation5 + $0xf4] sm:$0xf]
    %v133 = vld [vmem:[#allocation5 + $0xf8] sm:$0xf]
    %v134 = vld [vmem:[#allocation5 + $0xfc] sm:$0xf]
    %v199 = vunpack.c.l.b16 %v71
    %v200 = vunpack.c.l.b16 %v72
    %v201 = vunpack.c.l.b16 %v73
    %v202 = vunpack.c.l.b16 %v74
    %v203 = vunpack.c.l.b16 %v75
    %v204 = vunpack.c.l.b16 %v76
    %v205 = vunpack.c.l.b16 %v77
    %v206 = vunpack.c.l.b16 %v78
    %v207 = vunpack.c.l.b16 %v79
    %v208 = vunpack.c.l.b16 %v80
    %v209 = vunpack.c.l.b16 %v81
    %v210 = vunpack.c.l.b16 %v82
    %v211 = vunpack.c.l.b16 %v83
    %v212 = vunpack.c.l.b16 %v84
    %v213 = vunpack.c.l.b16 %v85
    %v214 = vunpack.c.l.b16 %v86
    %v215 = vunpack.c.l.b16 %v87
    %v216 = vunpack.c.l.b16 %v88
    %v217 = vunpack.c.l.b16 %v89
    %v218 = vunpack.c.l.b16 %v90
    %v219 = vunpack.c.l.b16 %v91
    %v220 = vunpack.c.l.b16 %v92
    %v221 = vunpack.c.l.b16 %v93
    %v222 = vunpack.c.l.b16 %v94
    %v223 = vunpack.c.l.b16 %v95
    %v224 = vunpack.c.l.b16 %v96
    %v225 = vunpack.c.l.b16 %v97
    %v226 = vunpack.c.l.b16 %v98
    %v227 = vunpack.c.l.b16 %v99
    %v228 = vunpack.c.l.b16 %v100
    %v229 = vunpack.c.l.b16 %v101
    %v230 = vunpack.c.l.b16 %v102
    %v231 = vunpack.c.l.b16 %v103
    %v232 = vunpack.c.l.b16 %v104
    %v233 = vunpack.c.l.b16 %v105
    %v234 = vunpack.c.l.b16 %v106
    %v235 = vunpack.c.l.b16 %v107
    %v236 = vunpack.c.l.b16 %v108
    %v237 = vunpack.c.l.b16 %v109
    %v238 = vunpack.c.l.b16 %v110
    %v239 = vunpack.c.l.b16 %v111
    %v240 = vunpack.c.l.b16 %v112
    %v241 = vunpack.c.l.b16 %v113
    %v242 = vunpack.c.l.b16 %v114
    %v243 = vunpack.c.l.b16 %v115
    %v244 = vunpack.c.l.b16 %v116
    %v245 = vunpack.c.l.b16 %v117
    %v246 = vunpack.c.l.b16 %v118
    %v247 = vunpack.c.l.b16 %v119
    %v248 = vunpack.c.l.b16 %v120
    %v249 = vunpack.c.l.b16 %v121
    %v250 = vunpack.c.l.b16 %v122
    %v251 = vunpack.c.l.b16 %v123
    %v252 = vunpack.c.l.b16 %v124
    %v253 = vunpack.c.l.b16 %v125
    %v254 = vunpack.c.l.b16 %v126
    %v255 = vunpack.c.l.b16 %v127
    %v256 = vunpack.c.l.b16 %v128
    %v257 = vunpack.c.l.b16 %v129
    %v258 = vunpack.c.l.b16 %v130
    %v259 = vunpack.c.l.b16 %v131
    %v260 = vunpack.c.l.b16 %v132
    %v261 = vunpack.c.l.b16 %v133
    %v262 = vunpack.c.l.b16 %v134
    %v263 = vpack.c.b16 %v200, %v199
    %v264 = vpack.c.b16 %v202, %v201
    %v265 = vpack.c.b16 %v204, %v203
    %v266 = vpack.c.b16 %v206, %v205
    %v267 = vpack.c.b16 %v208, %v207
    %v268 = vpack.c.b16 %v210, %v209
    %v269 = vpack.c.b16 %v212, %v211
    %v270 = vpack.c.b16 %v214, %v213
    %v271 = vpack.c.b16 %v216, %v215
    %v272 = vpack.c.b16 %v218, %v217
    %v273 = vpack.c.b16 %v220, %v219
    %v274 = vpack.c.b16 %v222, %v221
    %v275 = vpack.c.b16 %v224, %v223
    %v276 = vpack.c.b16 %v226, %v225
    %v277 = vpack.c.b16 %v228, %v227
    %v278 = vpack.c.b16 %v230, %v229
    %v279 = vpack.c.b16 %v232, %v231
    %v280 = vpack.c.b16 %v234, %v233
    %v281 = vpack.c.b16 %v236, %v235
    %v282 = vpack.c.b16 %v238, %v237
    %v283 = vpack.c.b16 %v240, %v239
    %v284 = vpack.c.b16 %v242, %v241
    %v285 = vpack.c.b16 %v244, %v243
    %v286 = vpack.c.b16 %v246, %v245
    %v287 = vpack.c.b16 %v248, %v247
    %v288 = vpack.c.b16 %v250, %v249
    %v289 = vpack.c.b16 %v252, %v251
    %v290 = vpack.c.b16 %v254, %v253
    %v291 = vpack.c.b16 %v256, %v255
    %v292 = vpack.c.b16 %v258, %v257
    %v293 = vpack.c.b16 %v260, %v259
    %v294 = vpack.c.b16 %v262, %v261
    %327 = vmatprep.subr.bf16.mxu0 0
    %328 = vmatpush1.bf16.msra.mxu0 %v263
    %329 = vmatprep.subr.bf16.mxu0 0
    %330 = vmatpush1.bf16.msra.mxu0 %v264
    %331 = vmatprep.subr.bf16.mxu0 0
    %332 = vmatpush1.bf16.msra.mxu0 %v265
    %333 = vmatprep.subr.bf16.mxu0 0
    %334 = vmatpush1.bf16.msra.mxu0 %v266
    %335 = vmatprep.subr.bf16.mxu0 0
    %336 = vmatpush1.bf16.msra.mxu0 %v267
    %337 = vmatprep.subr.bf16.mxu0 0
    %338 = vmatpush1.bf16.msra.mxu0 %v268
    %339 = vmatprep.subr.bf16.mxu0 0
    %340 = vmatpush1.bf16.msra.mxu0 %v269
    %341 = vmatprep.subr.bf16.mxu0 0
    %342 = vmatpush1.bf16.msra.mxu0 %v270
    %343 = vmatprep.subr.bf16.mxu0 0
    %344 = vmatpush1.bf16.msra.mxu0 %v271
    %345 = vmatprep.subr.bf16.mxu0 0
    %346 = vmatpush1.bf16.msra.mxu0 %v272
    %347 = vmatprep.subr.bf16.mxu0 0
    %348 = vmatpush1.bf16.msra.mxu0 %v273
    %349 = vmatprep.subr.bf16.mxu0 0
    %350 = vmatpush1.bf16.msra.mxu0 %v274
    %351 = vmatprep.subr.bf16.mxu0 0
    %352 = vmatpush1.bf16.msra.mxu0 %v275
    %353 = vmatprep.subr.bf16.mxu0 0
    %354 = vmatpush1.bf16.msra.mxu0 %v276
    %355 = vmatprep.subr.bf16.mxu0 0
    %356 = vmatpush1.bf16.msra.mxu0 %v277
    %357 = vmatprep.subr.bf16.mxu0 0
    %358 = vmatpush1.bf16.msra.mxu0 %v278
    %359 = vmatprep.mubr.bf16.mxu0 %v67
    %360 = vmatmul.mubr.bf16.gmra.mrb[0].mxu0 %v66
    %v361 = vpop.f32.mrb[0].mxu0
    %v362 = vadd.f32 0.0, %v361
    %v363 = vpop.f32.mrb[0].mxu0
    %v364 = vpop.f32.mrb[0].mxu0
    %v365 = vpop.f32.mrb[0].mxu0
    %366 = vdwg.mxu0
    %367 = vmatprep.subr.bf16.mxu0 0
    %368 = vmatpush1.bf16.msra.mxu0 %v279
    %369 = vmatprep.subr.bf16.mxu0 0
    %370 = vmatpush1.bf16.msra.mxu0 %v280
    %371 = vmatprep.subr.bf16.mxu0 0
    %372 = vmatpush1.bf16.msra.mxu0 %v281
    %373 = vmatprep.subr.bf16.mxu0 0
    %374 = vmatpush1.bf16.msra.mxu0 %v282
    %375 = vmatprep.subr.bf16.mxu0 0
    %376 = vmatpush1.bf16.msra.mxu0 %v283
    %377 = vmatprep.subr.bf16.mxu0 0
    %378 = vmatpush1.bf16.msra.mxu0 %v284
    %379 = vmatprep.subr.bf16.mxu0 0
    %380 = vmatpush1.bf16.msra.mxu0 %v285
    %381 = vmatprep.subr.bf16.mxu0 0
    %382 = vmatpush1.bf16.msra.mxu0 %v286
    %383 = vmatprep.subr.bf16.mxu0 0
    %384 = vmatpush1.bf16.msra.mxu0 %v287
    %385 = vmatprep.subr.bf16.mxu0 0
    %386 = vmatpush1.bf16.msra.mxu0 %v288
    %387 = vmatprep.subr.bf16.mxu0 0
    %388 = vmatpush1.bf16.msra.mxu0 %v289
    %389 = vmatprep.subr.bf16.mxu0 0
    %390 = vmatpush1.bf16.msra.mxu0 %v290
    %391 = vmatprep.subr.bf16.mxu0 0
    %392 = vmatpush1.bf16.msra.mxu0 %v291
    %393 = vmatprep.subr.bf16.mxu0 0
    %394 = vmatpush1.bf16.msra.mxu0 %v292
    %395 = vmatprep.subr.bf16.mxu0 0
    %396 = vmatpush1.bf16.msra.mxu0 %v293
    %397 = vmatprep.subr.bf16.mxu0 0
    %398 = vmatpush1.bf16.msra.mxu0 %v294
    %399 = vmatprep.mubr.bf16.mxu0 %v69
    %400 = vmatmul.mubr.bf16.gmra.mrb[0].mxu0 %v68
    %v401 = vpop.f32.mrb[0].mxu0
    %v402 = vadd.f32 %v362, %v401
    %v403 = vpop.f32.mrb[0].mxu0
    %v404 = vpop.f32.mrb[0].mxu0
    %v405 = vpop.f32.mrb[0].mxu0
    %406 = vdwg.mxu0
    %v407 = vrot.slane %v402, 4
    %v408 = vadd.f32 %v402, %v407
    %v409 = vrot.slane %v408, 2
    %v410 = vadd.f32 %v408, %v409
    %v411 = vrot.slane %v410, 1
    %v412 = vadd.f32 %v410, %v411
    %v413 = vmul.f32 %v402, %v402
    %v414 = vrot.slane %v413, 4
    %v415 = vadd.f32 %v413, %v414
    %v416 = vrot.slane %v415, 2
    %v417 = vadd.f32 %v415, %v416
    %v418 = vrot.slane %v417, 1
    %v419 = vadd.f32 %v417, %v418
    %v420 = vmul.f32 %v412, 0.125
    %v421 = vmul.f32 %v419, 0.125
    %v422 = vmul.f32 %v420, %v420
    %v423 = vsub.f32 %v421, %v422
    %v424 = vadd.f32 %v423, 1e-05
    %v425 = vrsqrt.pop %v424
    %v426 = vmul.f32 %v70, %v425
    %v427 = vmul.f32 %v420, %v426
    %v429 = vrot.slane %v427, 7
    %v431 = vsub.f32 %v70, %v429
    %v432 = vlaneseq
    %v433 = vshrl.u32 %v432, 7
    %v434 = vsub.s32 0, %v433
    %v435 = vrot.slane %v426, %v434
    %v436 = vmul.f32 %v402, %v435
    %v437 = vlaneseq
    %v438 = vshrl.u32 %v437, 7
    %v439 = vsub.s32 1, %v438
    %v440 = vrot.slane %v431, %v439
    %v441 = vadd.f32 %v436, %v440
    %v442 = vsub.f32 0.0, %v441
    %v443 = vmul.f32 %v442, 1.442695
    %v444 = vpow.pop %v443
    %v445 = vadd.f32 %v444, 1.0
    %v446 = vrcp.pop %v445
    %v447 = vpack.c.bf16 %v446, %v446
    %v448 = vld [vmem:[#allocation7] sm:$0xf]
    %v449 = vld [vmem:[#allocation7 + $0x4] sm:$0xf]
    %v450 = vld [vmem:[#allocation7 + $0x8] sm:$0xf]
    %v451 = vld [vmem:[#allocation7 + $0xc] sm:$0xf]
    %v452 = vld [vmem:[#allocation7 + $0x10] sm:$0xf]
    %v453 = vld [vmem:[#allocation7 + $0x14] sm:$0xf]
    %v454 = vld [vmem:[#allocation7 + $0x18] sm:$0xf]
    %v455 = vld [vmem:[#allocation7 + $0x1c] sm:$0xf]
    %v456 = vld [vmem:[#allocation7 + $0x20] sm:$0xf]
    %v457 = vld [vmem:[#allocation7 + $0x24] sm:$0xf]
    %v458 = vld [vmem:[#allocation7 + $0x28] sm:$0xf]
    %v459 = vld [vmem:[#allocation7 + $0x2c] sm:$0xf]
    %v460 = vld [vmem:[#allocation7 + $0x30] sm:$0xf]
    %v461 = vld [vmem:[#allocation7 + $0x34] sm:$0xf]
    %v462 = vld [vmem:[#allocation7 + $0x38] sm:$0xf]
    %v463 = vld [vmem:[#allocation7 + $0x3c] sm:$0xf]
    %v464 = vlaneseq
    %v465 = vshrl.u32 %v464, 7
    %v466 = vsub.s32 2, %v465
    %v467 = vrot.slane %v70, %v466
    %v484 = vunpack.c.l.b16 %v448
    %v485 = vunpack.c.l.b16 %v449
    %v486 = vunpack.c.l.b16 %v450
    %v487 = vunpack.c.l.b16 %v451
    %v488 = vunpack.c.l.b16 %v452
    %v489 = vunpack.c.l.b16 %v453
    %v490 = vunpack.c.l.b16 %v454
    %v491 = vunpack.c.l.b16 %v455
    %v492 = vunpack.c.l.b16 %v456
    %v493 = vunpack.c.l.b16 %v457
    %v494 = vunpack.c.l.b16 %v458
    %v495 = vunpack.c.l.b16 %v459
    %v496 = vunpack.c.l.b16 %v460
    %v497 = vunpack.c.l.b16 %v461
    %v498 = vunpack.c.l.b16 %v462
    %v499 = vunpack.c.l.b16 %v463
    %v500 = vpack.c.b16 %v485, %v484
    %v501 = vpack.c.b16 %v487, %v486
    %v502 = vpack.c.b16 %v489, %v488
    %v503 = vpack.c.b16 %v491, %v490
    %v504 = vpack.c.b16 %v493, %v492
    %v505 = vpack.c.b16 %v495, %v494
    %v506 = vpack.c.b16 %v497, %v496
    %v507 = vpack.c.b16 %v499, %v498
    %516 = vmatprep.subr.bf16.mxu0 0
    %517 = vmatpush1.bf16.msra.mxu0 %v500
    %518 = vmatprep.subr.bf16.mxu0 0
    %519 = vmatpush1.bf16.msra.mxu0 %v501
    %520 = vmatprep.subr.bf16.mxu0 0
    %521 = vmatpush1.bf16.msra.mxu0 %v502
    %522 = vmatprep.subr.bf16.mxu0 0
    %523 = vmatpush1.bf16.msra.mxu0 %v503
    %524 = vmatprep.subr.bf16.mxu0 0
    %525 = vmatpush1.bf16.msra.mxu0 %v504
    %526 = vmatprep.subr.bf16.mxu0 0
    %527 = vmatpush1.bf16.msra.mxu0 %v505
    %528 = vmatprep.subr.bf16.mxu0 0
    %529 = vmatpush1.bf16.msra.mxu0 %v506
    %530 = vmatprep.subr.bf16.mxu0 0
    %531 = vmatpush1.bf16.msra.mxu0 %v507
    %532 = vmatprep.subr.bf16.mxu0 0
    %533 = vmatpush1.bf16.msra.mxu0 0
    %534 = vmatprep.subr.bf16.mxu0 0
    %535 = vmatpush1.bf16.msra.mxu0 0
    %536 = vmatprep.subr.bf16.mxu0 0
    %537 = vmatpush1.bf16.msra.mxu0 0
    %538 = vmatprep.subr.bf16.mxu0 0
    %539 = vmatpush1.bf16.msra.mxu0 0
    %540 = vmatprep.subr.bf16.mxu0 0
    %541 = vmatpush1.bf16.msra.mxu0 0
    %542 = vmatprep.subr.bf16.mxu0 0
    %543 = vmatpush1.bf16.msra.mxu0 0
    %544 = vmatprep.subr.bf16.mxu0 0
    %545 = vmatpush1.bf16.msra.mxu0 0
    %546 = vmatprep.subr.bf16.mxu0 0
    %547 = vmatpush1.bf16.msra.mxu0 0
    %548 = vmatprep.mubr.bf16.mxu0 0
    %549 = vmatmul.mubr.bf16.gmra.mrb[0].mxu0 %v447
    %v550 = vpop.f32.mrb[0].mxu0
    %v551 = vadd.f32 %v467, %v550
    %v552 = vpop.f32.mrb[0].mxu0
    %v553 = vpop.f32.mrb[0].mxu0
    %v554 = vpop.f32.mrb[0].mxu0
    %555 = vdwg.mxu0
    %v556 = vtanh.pop %v551
    %557 = vst [vmem:[#allocation8] sm:$0xff] %v556
    // Predicated region
    $region30: #{tpu_custom_call.1} parent=1 // pred_check
      _
    $region31: #{tpu_custom_call.1} parent=1 // pred_check_branch
      %559 = sbr.rel (0) target = $region33
    $region32: #{tpu_custom_call.1} parent=1 // pred_region
      %s561 = ssub.s32 128, 128
      %562 = vsyncadd [#allocation4], %s561
      %s564 = sshll.u32 [#allocation8], 4
      %s565 = int_to_ptr.vmem [resolvable:$true] %s564
      %567 = dma.vmem_to_hbm [thread:$0]  %s565, 128, %s4, [#allocation4]
    $region33: #{tpu_custom_call.1} parent=1 // pred_fallthru
      _
    // Predicated region
    $region34: #{tpu_custom_call.1} parent=1 // pred_check
      _
    $region35: #{tpu_custom_call.1} parent=1 // pred_check_branch
      %569 = sbr.rel (0) target = $region37
    $region36: #{tpu_custom_call.1} parent=1 // pred_region
      %570 = dma.done [#allocation4], 128
    $region37: #{tpu_custom_call.1} parent=1 // pred_fallthru
      _
    %571 = vsyncpa [#allocation3], 1
    %572 = vsyncpa [#allocation6], 1
    %573 = vsyncpa [#allocation4], 1

</llo_original>
